<compile_context>
chip_gen: v7x
topology: tpu7x:2x2x1
jax: 0.10.0
libtpu: 0.0.40
codegen_flags: <defaults>
</compile_context>

<pallas_src>
import functools
import math

import jax
import jax.numpy as jnp
from jax.experimental import pallas as pl
from jax.experimental.pallas import tpu as pltpu


def _round_up(x, m):
    return ((x + m - 1) // m) * m


def _erf_poly(x):
    # Abramowitz & Stegun 7.1.26 (max abs error ~1.5e-7). Uses only exp + VPU arithmetic,
    # so it lowers cleanly in Mosaic; accuracy is far below the validation tolerance.
    p = 0.3275911
    a1, a2, a3, a4, a5 = 0.254829592, -0.284496736, 1.421413741, -1.453152027, 1.061405429
    ax = jnp.abs(x)
    t = 1.0 / (1.0 + p * ax)
    poly = t * (a1 + t * (a2 + t * (a3 + t * (a4 + t * a5))))
    r = 1.0 - poly * jnp.exp(-ax * ax)
    return jnp.where(x < 0.0, -r, r)


def ffn_kernel(x_ref, g1_ref, b1_ref, w1_ref, bw1_ref, w2_ref, bw2_ref,
               g2_ref, b2_ref, o_ref, xn_ref, acc_ref, *, gelu_approximate):
    eps = 1e-5
    k = pl.program_id(1)

    @pl.when(k == 0)
    def _():
        # LayerNorm #1 over d_model, f32 math, single-pass stats (E[x], E[x^2]).
        x = x_ref[...].astype(jnp.float32)
        mu = jnp.mean(x, axis=-1, keepdims=True)
        var = jnp.mean(x * x, axis=-1, keepdims=True) - mu * mu
        xn = (x - mu) * jax.lax.rsqrt(var + eps)
        xn = xn * g1_ref[...] + b1_ref[...]
        xn_ref[...] = xn.astype(xn_ref.dtype)      # MXU-operand dtype (bf16 fast path)
        acc_ref[...] = jnp.zeros_like(acc_ref)     # f32 accumulator over d_ff chunks

    # Linear(d_model -> d_ff) chunk + GELU (f32 accumulation on the MXU).
    h = jnp.dot(xn_ref[...], w1_ref[...],
                preferred_element_type=jnp.float32) + bw1_ref[...]
    if gelu_approximate:
        h = jax.nn.gelu(h, approximate=True)        # tanh GELU: single EUP op
    else:
        h = 0.5 * h * (1.0 + _erf_poly(h * (1.0 / math.sqrt(2.0))))  # torch-default erf GELU

    # (Dropout: identity in eval mode)

    # Accumulate Linear(d_ff -> d_model) contribution of this d_ff chunk.
    acc_ref[...] += jnp.dot(h.astype(w2_ref.dtype), w2_ref[...],
                            preferred_element_type=jnp.float32)

    @pl.when(k == pl.num_programs(1) - 1)
    def _():
        # Bias of Linear #2, (Dropout: identity), then LayerNorm #2 over d_model.
        y = acc_ref[...] + bw2_ref[...]
        mu2 = jnp.mean(y, axis=-1, keepdims=True)
        var2 = jnp.mean(y * y, axis=-1, keepdims=True) - mu2 * mu2
        yn = (y - mu2) * jax.lax.rsqrt(var2 + eps)
        o_ref[...] = (yn * g2_ref[...] + b2_ref[...]).astype(o_ref.dtype)


@functools.partial(jax.jit, static_argnames=("block_rows", "block_dff",
                                              "matmul_dtype", "gelu_approximate"))
def simple_feed_forward(x, params, block_rows=512, block_dff=None,
                        matmul_dtype=jnp.bfloat16, gelu_approximate=False):
    """x: [B, S, d_model] -> [B, S, d_model].

    matmul_dtype: MXU-operand dtype for the two GEMMs (default bf16, f32 accumulation —
    the native MXU path on v5e/v6e/v7x). Pass jnp.float32 for the exact-operand
    validation path. block_dff overrides the automatic d_ff chunk size.
    """
    B, S, D = x.shape
    d_ff = params["w1"].shape[1]
    N = B * S
    x2d = x.reshape(N, D)

    w1 = params["w1"]
    w2 = params["w2"]
    if matmul_dtype is not None:
        w1 = w1.astype(matmul_dtype)
        w2 = w2.astype(matmul_dtype)
    wbytes = jnp.dtype(w1.dtype).itemsize
    xbytes = jnp.dtype(x.dtype).itemsize

    # Generation-aware VMEM budget: 128 MiB on v5e/v6e, 64 MiB/TC on v7x.
    try:
        info = pltpu.get_tpu_info()
        cap = int(getattr(info, "vmem_capacity_bytes", 64 * 1024 * 1024))
    except Exception:  # non-TPU / query failure: conservative (v7x-sized) default
        cap = 64 * 1024 * 1024
    vmem_limit = int(0.85 * cap)
    fit_budget = int(0.75 * vmem_limit)   # headroom for compiler scratch

    # Row tile: large (MXU-friendly), multiple of 8, clamped for tiny N.
    br = max(8, min(block_rows, _round_up(N, 8)))
    br = _round_up(br, 8)

    def vmem_need(br_, tk_):
        return (2 * 2 * br_ * D * xbytes          # x in + out tiles, double-buffered
                + br_ * D * (wbytes + 4)          # xn scratch + f32 accumulator
                + 2 * 2 * D * tk_ * wbytes        # W1 + W2 chunks, double-buffered
                + 2 * tk_ * 4                     # bias1 chunk, double-buffered
                + br_ * tk_ * (4 + wbytes)        # h (f32) + MXU-operand copy
                + 8 * D * 4 + 64 * 1024)          # small params + slack

    # d_ff chunk size: tk == d_ff when everything fits (weights fetched once for the
    # whole grid); otherwise stream 128-aligned chunks (required on v7x / large d_ff).
    if block_dff is not None:
        tk = min(d_ff, block_dff)
        if tk < d_ff:
            tk = max(128, _round_up(tk, 128))
    else:
        tk = d_ff
        while tk > 128 and vmem_need(br, tk) > fit_budget:
            tk = max(128, _round_up((tk + 1) // 2, 128))
    while br > 64 and vmem_need(br, tk) > fit_budget:
        br = max(64, _round_up(br // 2, 8))

    d_ff_pad = _round_up(d_ff, tk)
    kchunks = d_ff_pad // tk

    # 1-D params -> (1, dim) rows so they broadcast cleanly inside the kernel.
    g1 = params["ln1_g"].reshape(1, D).astype(jnp.float32)
    b1 = params["ln1_b"].reshape(1, D).astype(jnp.float32)
    bw1 = params["b1"].reshape(1, d_ff).astype(jnp.float32)
    bw2 = params["b2"].reshape(1, D).astype(jnp.float32)
    g2 = params["ln2_g"].reshape(1, D).astype(jnp.float32)
    b2 = params["ln2_b"].reshape(1, D).astype(jnp.float32)

    # Zero-pad the weights along d_ff if the chunk doesn't divide it (padded hidden
    # units produce GELU(0)=0 and contribute nothing). Activations are never padded.
    if d_ff_pad != d_ff:
        w1 = jnp.pad(w1, ((0, 0), (0, d_ff_pad - d_ff)))
        w2 = jnp.pad(w2, ((0, d_ff_pad - d_ff), (0, 0)))
        bw1 = jnp.pad(bw1, ((0, 0), (0, d_ff_pad - d_ff)))

    n_row_tiles = -(-N // br)
    grid = (n_row_tiles, kchunks)

    row_spec = pl.BlockSpec((br, D), lambda i, k: (i, 0))
    # Small constant operands: whole-array, VMEM-resident, no pipelining/double-buffer.
    vmem_const = pl.BlockSpec(memory_space=pltpu.MemorySpace.VMEM)
    in_specs = [
        row_spec,                                       # x rows
        vmem_const, vmem_const,                         # LN1 gamma, beta
        pl.BlockSpec((D, tk), lambda i, k: (0, k)),     # W1 chunk
        pl.BlockSpec((1, tk), lambda i, k: (0, k)),     # Linear-1 bias chunk
        pl.BlockSpec((tk, D), lambda i, k: (k, 0)),     # W2 chunk
        vmem_const,                                     # Linear-2 bias
        vmem_const, vmem_const,                         # LN2 gamma, beta
    ]

    # Advisory cost estimate: two GEMMs dominate; weights re-streamed per row tile
    # only when the d_ff axis is chunked.
    weight_passes = 1 if kchunks == 1 else n_row_tiles
    cost = pl.CostEstimate(
        flops=int(4 * N * D * d_ff),
        transcendentals=int(N * d_ff),
        bytes_accessed=int(2 * N * D * xbytes
                           + weight_passes * 2 * D * d_ff_pad * wbytes
                           + (2 * d_ff_pad + 6 * D) * 4),
    )

    kernel = functools.partial(ffn_kernel, gelu_approximate=bool(gelu_approximate))

    out2d = pl.pallas_call(
        kernel,
        out_shape=jax.ShapeDtypeStruct((N, D), x.dtype),
        grid_spec=pltpu.PrefetchScalarGridSpec(
            num_scalar_prefetch=0,
            grid=grid,
            in_specs=in_specs,
            out_specs=row_spec,
            scratch_shapes=[
                pltpu.VMEM((br, D), w1.dtype),      # LN1 output in MXU-operand dtype
                pltpu.VMEM((br, D), jnp.float32),   # f32 accumulator over d_ff chunks
            ],
        ),
        compiler_params=pltpu.CompilerParams(
            dimension_semantics=("parallel", "arbitrary"),
            vmem_limit_bytes=vmem_limit,
        ),
        cost_estimate=cost,
    )(x2d, g1, b1, w1, bw1, w2, bw2, g2, b2)

    return out2d.reshape(B, S, D)


def init_params(key, d_model, d_ff):
    k1, k2 = jax.random.split(key)
    # Linear weights ~ N(0, 0.02), biases zero; LayerNorm gamma=1, beta=0 (matches torch init).
    return {
        "ln1_g": jnp.ones((d_model,), jnp.float32),
        "ln1_b": jnp.zeros((d_model,), jnp.float32),
        # stored as [in, out] (transpose of torch's [out, in]); same distribution.
        "w1": 0.02 * jax.random.normal(k1, (d_model, d_ff), jnp.float32),
        "b1": jnp.zeros((d_ff,), jnp.float32),
        "w2": 0.02 * jax.random.normal(k2, (d_ff, d_model), jnp.float32),
        "b2": jnp.zeros((d_model,), jnp.float32),
        "ln2_g": jnp.ones((d_model,), jnp.float32),
        "ln2_b": jnp.zeros((d_model,), jnp.float32),
    }


def _reference(x, p):
    eps = 1e-5

    def ln(v, g, b):
        mu = jnp.mean(v, axis=-1, keepdims=True)
        var = jnp.mean((v - mu) ** 2, axis=-1, keepdims=True)
        return (v - mu) * jax.lax.rsqrt(var + eps) * g + b

    h = ln(x, p["ln1_g"], p["ln1_b"])
    h = jax.nn.gelu(h @ p["w1"] + p["b1"], approximate=False)
    y = h @ p["w2"] + p["b2"]
    return ln(y, p["ln2_g"], p["ln2_b"])


if __name__ == "__main__":
    B, S, d_model, d_ff = 2, 8, 32, 64
    key = jax.random.PRNGKey(0)
    kx, kp = jax.random.split(key)
    x = jax.random.normal(kx, (B, S, d_model), jnp.float32)
    params = init_params(kp, d_model, d_ff)
    ref = _reference(x, params)

    # Default fast path: bf16 MXU operands, f32 accumulation.
    out_bf16 = jax.block_until_ready(simple_feed_forward(x, params))
    assert out_bf16.shape == (B, S, d_model)
    assert jnp.allclose(out_bf16, ref, atol=5e-2, rtol=5e-2), "mismatch vs reference (bf16)"

    # f32 MXU-operand validation path.
    out_f32 = jax.block_until_ready(
        simple_feed_forward(x, params, matmul_dtype=jnp.float32))
    assert jnp.allclose(out_f32, ref, atol=2e-2, rtol=2e-2), "mismatch vs reference (f32)"

    # Streamed-weights path: multiple d_ff chunks + multiple row tiles (exercises the
    # accumulator init/step/finalize across the 'arbitrary' reduction axis).
    params_big = init_params(jax.random.PRNGKey(2), d_model, 256)
    x_big = jax.random.normal(jax.random.PRNGKey(3), (2, 24, d_model), jnp.float32)
    out_big = jax.block_until_ready(
        simple_feed_forward(x_big, params_big, block_rows=16, block_dff=128,
                            matmul_dtype=jnp.float32))
    ref_big = _reference(x_big, params_big)
    assert jnp.allclose(out_big, ref_big, atol=2e-2, rtol=2e-2), "mismatch (chunked d_ff)"

    # Ragged tail: B*S not a multiple of the row tile / of 8 (no host-side pad/slice).
    x_odd = jax.random.normal(jax.random.PRNGKey(1), (3, 5, d_model), jnp.float32)
    out_odd = jax.block_until_ready(
        simple_feed_forward(x_odd, params, matmul_dtype=jnp.float32))
    ref_odd = _reference(x_odd, params)
    assert out_odd.shape == (3, 5, d_model)
    assert jnp.allclose(out_odd, ref_odd, atol=2e-2, rtol=2e-2), "mismatch (ragged tail)"

    print("KERNEL_OK")
</pallas_src>

<mosaic_0001>
module attributes {stable_mosaic.version = 11 : i64} {
  func.func @ffn_kernel(%arg0: i32, %arg1: i32, %arg2: memref<16x32xf32, #tpu.memory_space<vmem>>, %arg3: memref<1x32xf32, #tpu.memory_space<vmem>>, %arg4: memref<1x32xf32, #tpu.memory_space<vmem>>, %arg5: memref<32x64xbf16, #tpu.memory_space<vmem>>, %arg6: memref<1x64xf32, #tpu.memory_space<vmem>>, %arg7: memref<64x32xbf16, #tpu.memory_space<vmem>>, %arg8: memref<1x32xf32, #tpu.memory_space<vmem>>, %arg9: memref<1x32xf32, #tpu.memory_space<vmem>>, %arg10: memref<1x32xf32, #tpu.memory_space<vmem>>, %arg11: memref<16x32xf32, #tpu.memory_space<vmem>>, %arg12: memref<16x32xbf16, #tpu.memory_space<vmem>>, %arg13: memref<16x32xf32, #tpu.memory_space<vmem>>) attributes {dimension_semantics = [#tpu.dimension_semantics<parallel>, #tpu.dimension_semantics<arbitrary>], iteration_bounds = array<i64: 1, 1>, scalar_prefetch = 0 : i64, scratch_operands = 2 : i64, tpu.core_type = #tpu.core_type<tc>, window_params = [{transform_indices = @transform_0, window_bounds = array<i64: 16, 32>}, {pipeline_mode = #tpu.pipeline_mode<synchronous>, transform_indices = @transform_1, window_bounds = array<i64: 1, 32>}, {pipeline_mode = #tpu.pipeline_mode<synchronous>, transform_indices = @transform_2, window_bounds = array<i64: 1, 32>}, {transform_indices = @transform_3, window_bounds = array<i64: 32, 64>}, {transform_indices = @transform_4, window_bounds = array<i64: 1, 64>}, {transform_indices = @transform_5, window_bounds = array<i64: 64, 32>}, {pipeline_mode = #tpu.pipeline_mode<synchronous>, transform_indices = @transform_6, window_bounds = array<i64: 1, 32>}, {pipeline_mode = #tpu.pipeline_mode<synchronous>, transform_indices = @transform_7, window_bounds = array<i64: 1, 32>}, {pipeline_mode = #tpu.pipeline_mode<synchronous>, transform_indices = @transform_8, window_bounds = array<i64: 1, 32>}, {transform_indices = @transform_9, window_bounds = array<i64: 16, 32>}]} {
    %c0_i32 = arith.constant 0 : i32
    %0 = arith.cmpi eq, %arg1, %c0_i32 : i32
    %1 = arith.extui %0 : i1 to i32
    %c0_i32_0 = arith.constant 0 : i32
    %2 = arith.cmpi ne, %1, %c0_i32_0 : i32
    scf.if %2 {
      %c0_30 = arith.constant 0 : index
      %c0_31 = arith.constant 0 : index
      %58 = vector.load %arg2[%c0_30, %c0_31] : memref<16x32xf32, #tpu.memory_space<vmem>>, vector<16x32xf32>
      %cst_32 = arith.constant dense<0.000000e+00> : vector<16xf32>
      %59 = vector.multi_reduction <add>, %58, %cst_32 [1] : vector<16x32xf32> to vector<16xf32>
      %60 = vector.shape_cast %59 : vector<16xf32> to vector<16x1xf32>
      %cst_33 = arith.constant 3.200000e+01 : f32
      %61 = vector.broadcast %cst_33 : f32 to vector<16x1xf32>
      %62 = arith.divf %60, %61 : vector<16x1xf32>
      %63 = arith.mulf %58, %58 : vector<16x32xf32>
      %cst_34 = arith.constant dense<0.000000e+00> : vector<16xf32>
      %64 = vector.multi_reduction <add>, %63, %cst_34 [1] : vector<16x32xf32> to vector<16xf32>
      %65 = vector.shape_cast %64 : vector<16xf32> to vector<16x1xf32>
      %cst_35 = arith.constant 3.200000e+01 : f32
      %66 = vector.broadcast %cst_35 : f32 to vector<16x1xf32>
      %67 = arith.divf %65, %66 : vector<16x1xf32>
      %68 = arith.mulf %62, %62 : vector<16x1xf32>
      %69 = arith.subf %67, %68 : vector<16x1xf32>
      %70 = vector.broadcast %62 : vector<16x1xf32> to vector<16x32xf32>
      %71 = arith.subf %58, %70 : vector<16x32xf32>
      %cst_36 = arith.constant 9.99999974E-6 : f32
      %72 = vector.broadcast %cst_36 : f32 to vector<16x1xf32>
      %73 = arith.addf %69, %72 : vector<16x1xf32>
      %74 = math.rsqrt %73 : vector<16x1xf32>
      %75 = vector.broadcast %74 : vector<16x1xf32> to vector<16x32xf32>
      %76 = arith.mulf %71, %75 : vector<16x32xf32>
      %c0_37 = arith.constant 0 : index
      %c0_38 = arith.constant 0 : index
      %77 = vector.load %arg3[%c0_37, %c0_38] : memref<1x32xf32, #tpu.memory_space<vmem>>, vector<1x32xf32>
      %78 = vector.broadcast %77 : vector<1x32xf32> to vector<16x32xf32>
      %79 = arith.mulf %76, %78 : vector<16x32xf32>
      %c0_39 = arith.constant 0 : index
      %c0_40 = arith.constant 0 : index
      %80 = vector.load %arg4[%c0_39, %c0_40] : memref<1x32xf32, #tpu.memory_space<vmem>>, vector<1x32xf32>
      %81 = vector.broadcast %80 : vector<1x32xf32> to vector<16x32xf32>
      %82 = arith.addf %79, %81 : vector<16x32xf32>
      %83 = arith.truncf %82 : vector<16x32xf32> to vector<16x32xbf16>
      %c0_41 = arith.constant 0 : index
      %c0_42 = arith.constant 0 : index
      %84 = vector.load %arg12[%c0_41, %c0_42] : memref<16x32xbf16, #tpu.memory_space<vmem>>, vector<16x32xbf16>
      tpu.vector_store %arg12[%c0_41, %c0_42], %83 {strides = array<i32>} : memref<16x32xbf16, #tpu.memory_space<vmem>>, vector<16x32xbf16>,
      %cst_43 = arith.constant 0.000000e+00 : f32
      %85 = vector.broadcast %cst_43 : f32 to vector<16x32xf32>
      %c0_44 = arith.constant 0 : index
      %c0_45 = arith.constant 0 : index
      %86 = vector.load %arg13[%c0_44, %c0_45] : memref<16x32xf32, #tpu.memory_space<vmem>>, vector<16x32xf32>
      tpu.vector_store %arg13[%c0_44, %c0_45], %85 {strides = array<i32>} : memref<16x32xf32, #tpu.memory_space<vmem>>, vector<16x32xf32>,
    } else {
    }
    %c0 = arith.constant 0 : index
    %c0_1 = arith.constant 0 : index
    %3 = vector.load %arg12[%c0, %c0_1] : memref<16x32xbf16, #tpu.memory_space<vmem>>, vector<16x32xbf16>
    %c0_2 = arith.constant 0 : index
    %c0_3 = arith.constant 0 : index
    %4 = vector.load %arg5[%c0_2, %c0_3] : memref<32x64xbf16, #tpu.memory_space<vmem>>, vector<32x64xbf16>
    %cst = arith.constant dense<0.000000e+00> : vector<16x64xf32>
    %5 = tpu.matmul %3, %4, %cst {dimension_numbers = #tpu.dot_dimension_numbers<[1], [0], [0], [1], [0, 0, 1, 1], [], []>} : vector<16x32xbf16>, vector<32x64xbf16>, vector<16x64xf32> -> vector<16x64xf32>
    %c0_4 = arith.constant 0 : index
    %c0_5 = arith.constant 0 : index
    %6 = vector.load %arg6[%c0_4, %c0_5] : memref<1x64xf32, #tpu.memory_space<vmem>>, vector<1x64xf32>
    %7 = vector.broadcast %6 : vector<1x64xf32> to vector<16x64xf32>
    %8 = arith.addf %5, %7 : vector<16x64xf32>
    %cst_6 = arith.constant 5.000000e-01 : f32
    %9 = vector.broadcast %cst_6 : f32 to vector<16x64xf32>
    %10 = arith.mulf %9, %8 : vector<16x64xf32>
    %cst_7 = arith.constant 0.707106769 : f32
    %11 = vector.broadcast %cst_7 : f32 to vector<16x64xf32>
    %12 = arith.mulf %8, %11 : vector<16x64xf32>
    %13 = math.absf %12 : vector<16x64xf32>
    %cst_8 = arith.constant 0.327591091 : f32
    %14 = vector.broadcast %cst_8 : f32 to vector<16x64xf32>
    %15 = arith.mulf %14, %13 : vector<16x64xf32>
    %cst_9 = arith.constant 1.000000e+00 : f32
    %16 = vector.broadcast %cst_9 : f32 to vector<16x64xf32>
    %17 = arith.addf %16, %15 : vector<16x64xf32>
    %cst_10 = arith.constant 1.000000e+00 : f32
    %18 = vector.broadcast %cst_10 : f32 to vector<16x64xf32>
    %19 = arith.divf %18, %17 : vector<16x64xf32>
    %cst_11 = arith.constant 1.06140542 : f32
    %20 = vector.broadcast %cst_11 : f32 to vector<16x64xf32>
    %21 = arith.mulf %19, %20 : vector<16x64xf32>
    %cst_12 = arith.constant -1.45315206 : f32
    %22 = vector.broadcast %cst_12 : f32 to vector<16x64xf32>
    %23 = arith.addf %22, %21 : vector<16x64xf32>
    %24 = arith.mulf %19, %23 : vector<16x64xf32>
    %cst_13 = arith.constant 1.42141378 : f32
    %25 = vector.broadcast %cst_13 : f32 to vector<16x64xf32>
    %26 = arith.addf %25, %24 : vector<16x64xf32>
    %27 = arith.mulf %19, %26 : vector<16x64xf32>
    %cst_14 = arith.constant -0.284496725 : f32
    %28 = vector.broadcast %cst_14 : f32 to vector<16x64xf32>
    %29 = arith.addf %28, %27 : vector<16x64xf32>
    %30 = arith.mulf %19, %29 : vector<16x64xf32>
    %cst_15 = arith.constant 0.254829586 : f32
    %31 = vector.broadcast %cst_15 : f32 to vector<16x64xf32>
    %32 = arith.addf %31, %30 : vector<16x64xf32>
    %33 = arith.mulf %19, %32 : vector<16x64xf32>
    %cst_16 = arith.constant 0.000000e+00 : f32
    %34 = vector.broadcast %cst_16 : f32 to vector<16x64xf32>
    %35 = arith.subf %34, %13 : vector<16x64xf32>
    %36 = arith.mulf %35, %13 : vector<16x64xf32>
    %37 = math.exp %36 : vector<16x64xf32>
    %38 = arith.mulf %33, %37 : vector<16x64xf32>
    %cst_17 = arith.constant 1.000000e+00 : f32
    %39 = vector.broadcast %cst_17 : f32 to vector<16x64xf32>
    %40 = arith.subf %39, %38 : vector<16x64xf32>
    %cst_18 = arith.constant 0.000000e+00 : f32
    %41 = vector.broadcast %cst_18 : f32 to vector<16x64xf32>
    %42 = arith.cmpf olt, %12, %41 : vector<16x64xf32>
    %cst_19 = arith.constant 0.000000e+00 : f32
    %43 = vector.broadcast %cst_19 : f32 to vector<16x64xf32>
    %44 = arith.subf %43, %40 : vector<16x64xf32>
    %45 = arith.select %42, %44, %40 : vector<16x64xi1>, vector<16x64xf32>
    %cst_20 = arith.constant 1.000000e+00 : f32
    %46 = vector.broadcast %cst_20 : f32 to vector<16x64xf32>
    %47 = arith.addf %46, %45 : vector<16x64xf32>
    %48 = arith.mulf %10, %47 : vector<16x64xf32>
    %c0_21 = arith.constant 0 : index
    %c0_22 = arith.constant 0 : index
    %49 = vector.load %arg13[%c0_21, %c0_22] : memref<16x32xf32, #tpu.memory_space<vmem>>, vector<16x32xf32>
    %50 = arith.truncf %48 : vector<16x64xf32> to vector<16x64xbf16>
    %c0_23 = arith.constant 0 : index
    %c0_24 = arith.constant 0 : index
    %51 = vector.load %arg7[%c0_23, %c0_24] : memref<64x32xbf16, #tpu.memory_space<vmem>>, vector<64x32xbf16>
    %cst_25 = arith.constant dense<0.000000e+00> : vector<16x32xf32>
    %52 = tpu.matmul %50, %51, %cst_25 {dimension_numbers = #tpu.dot_dimension_numbers<[1], [0], [0], [1], [0, 0, 1, 1], [], []>} : vector<16x64xbf16>, vector<64x32xbf16>, vector<16x32xf32> -> vector<16x32xf32>
    %53 = arith.addf %49, %52 : vector<16x32xf32>
    %c0_26 = arith.constant 0 : index
    %c0_27 = arith.constant 0 : index
    %54 = vector.load %arg13[%c0_26, %c0_27] : memref<16x32xf32, #tpu.memory_space<vmem>>, vector<16x32xf32>
    tpu.vector_store %arg13[%c0_26, %c0_27], %53 {strides = array<i32>} : memref<16x32xf32, #tpu.memory_space<vmem>>, vector<16x32xf32>,
    %c0_i32_28 = arith.constant 0 : i32
    %55 = arith.cmpi eq, %arg1, %c0_i32_28 : i32
    %56 = arith.extui %55 : i1 to i32
    %c0_i32_29 = arith.constant 0 : i32
    %57 = arith.cmpi ne, %56, %c0_i32_29 : i32
    scf.if %57 {
      %c0_30 = arith.constant 0 : index
      %c0_31 = arith.constant 0 : index
      %58 = vector.load %arg13[%c0_30, %c0_31] : memref<16x32xf32, #tpu.memory_space<vmem>>, vector<16x32xf32>
      %c0_32 = arith.constant 0 : index
      %c0_33 = arith.constant 0 : index
      %59 = vector.load %arg8[%c0_32, %c0_33] : memref<1x32xf32, #tpu.memory_space<vmem>>, vector<1x32xf32>
      %60 = vector.broadcast %59 : vector<1x32xf32> to vector<16x32xf32>
      %61 = arith.addf %58, %60 : vector<16x32xf32>
      %cst_34 = arith.constant dense<0.000000e+00> : vector<16xf32>
      %62 = vector.multi_reduction <add>, %61, %cst_34 [1] : vector<16x32xf32> to vector<16xf32>
      %63 = vector.shape_cast %62 : vector<16xf32> to vector<16x1xf32>
      %cst_35 = arith.constant 3.200000e+01 : f32
      %64 = vector.broadcast %cst_35 : f32 to vector<16x1xf32>
      %65 = arith.divf %63, %64 : vector<16x1xf32>
      %66 = arith.mulf %61, %61 : vector<16x32xf32>
      %cst_36 = arith.constant dense<0.000000e+00> : vector<16xf32>
      %67 = vector.multi_reduction <add>, %66, %cst_36 [1] : vector<16x32xf32> to vector<16xf32>
      %68 = vector.shape_cast %67 : vector<16xf32> to vector<16x1xf32>
      %cst_37 = arith.constant 3.200000e+01 : f32
      %69 = vector.broadcast %cst_37 : f32 to vector<16x1xf32>
      %70 = arith.divf %68, %69 : vector<16x1xf32>
      %71 = arith.mulf %65, %65 : vector<16x1xf32>
      %72 = arith.subf %70, %71 : vector<16x1xf32>
      %73 = vector.broadcast %65 : vector<16x1xf32> to vector<16x32xf32>
      %74 = arith.subf %61, %73 : vector<16x32xf32>
      %cst_38 = arith.constant 9.99999974E-6 : f32
      %75 = vector.broadcast %cst_38 : f32 to vector<16x1xf32>
      %76 = arith.addf %72, %75 : vector<16x1xf32>
      %77 = math.rsqrt %76 : vector<16x1xf32>
      %78 = vector.broadcast %77 : vector<16x1xf32> to vector<16x32xf32>
      %79 = arith.mulf %74, %78 : vector<16x32xf32>
      %c0_39 = arith.constant 0 : index
      %c0_40 = arith.constant 0 : index
      %80 = vector.load %arg9[%c0_39, %c0_40] : memref<1x32xf32, #tpu.memory_space<vmem>>, vector<1x32xf32>
      %81 = vector.broadcast %80 : vector<1x32xf32> to vector<16x32xf32>
      %82 = arith.mulf %79, %81 : vector<16x32xf32>
      %c0_41 = arith.constant 0 : index
      %c0_42 = arith.constant 0 : index
      %83 = vector.load %arg10[%c0_41, %c0_42] : memref<1x32xf32, #tpu.memory_space<vmem>>, vector<1x32xf32>
      %84 = vector.broadcast %83 : vector<1x32xf32> to vector<16x32xf32>
      %85 = arith.addf %82, %84 : vector<16x32xf32>
      %c0_43 = arith.constant 0 : index
      %c0_44 = arith.constant 0 : index
      %86 = vector.load %arg11[%c0_43, %c0_44] : memref<16x32xf32, #tpu.memory_space<vmem>>, vector<16x32xf32>
      tpu.vector_store %arg11[%c0_43, %c0_44], %85 {strides = array<i32>} : memref<16x32xf32, #tpu.memory_space<vmem>>, vector<16x32xf32>,
    } else {
    }
    return
  }
  func.func @transform_0(%arg0: i32, %arg1: i32) -> (i32, i32) {
    %c0_i32 = arith.constant 0 : i32
    %c0_i32_0 = arith.constant 0 : i32
    return %arg0, %c0_i32 : i32, i32
  }
  func.func @transform_1(%arg0: i32, %arg1: i32) -> (i32, i32) {
    %c0_i32 = arith.constant 0 : i32
    %c0_i32_0 = arith.constant 0 : i32
    %c0_i32_1 = arith.constant 0 : i32
    return %c0_i32, %c0_i32_0 : i32, i32
  }
  func.func @transform_2(%arg0: i32, %arg1: i32) -> (i32, i32) {
    %c0_i32 = arith.constant 0 : i32
    %c0_i32_0 = arith.constant 0 : i32
    %c0_i32_1 = arith.constant 0 : i32
    return %c0_i32, %c0_i32_0 : i32, i32
  }
  func.func @transform_3(%arg0: i32, %arg1: i32) -> (i32, i32) {
    %c0_i32 = arith.constant 0 : i32
    %c0_i32_0 = arith.constant 0 : i32
    return %c0_i32, %arg1 : i32, i32
  }
  func.func @transform_4(%arg0: i32, %arg1: i32) -> (i32, i32) {
    %c0_i32 = arith.constant 0 : i32
    %c0_i32_0 = arith.constant 0 : i32
    return %c0_i32, %arg1 : i32, i32
  }
  func.func @transform_5(%arg0: i32, %arg1: i32) -> (i32, i32) {
    %c0_i32 = arith.constant 0 : i32
    %c0_i32_0 = arith.constant 0 : i32
    return %arg1, %c0_i32 : i32, i32
  }
  func.func @transform_6(%arg0: i32, %arg1: i32) -> (i32, i32) {
    %c0_i32 = arith.constant 0 : i32
    %c0_i32_0 = arith.constant 0 : i32
    %c0_i32_1 = arith.constant 0 : i32
    return %c0_i32, %c0_i32_0 : i32, i32
  }
  func.func @transform_7(%arg0: i32, %arg1: i32) -> (i32, i32) {
    %c0_i32 = arith.constant 0 : i32
    %c0_i32_0 = arith.constant 0 : i32
    %c0_i32_1 = arith.constant 0 : i32
    return %c0_i32, %c0_i32_0 : i32, i32
  }
  func.func @transform_8(%arg0: i32, %arg1: i32) -> (i32, i32) {
    %c0_i32 = arith.constant 0 : i32
    %c0_i32_0 = arith.constant 0 : i32
    %c0_i32_1 = arith.constant 0 : i32
    return %c0_i32, %c0_i32_0 : i32, i32
  }
  func.func @transform_9(%arg0: i32, %arg1: i32) -> (i32, i32) {
    %c0_i32 = arith.constant 0 : i32
    %c0_i32_0 = arith.constant 0 : i32
    return %arg0, %c0_i32 : i32, i32
  }
}

</mosaic_0001>

<llo_original>
// kernel: simple_feed_forward.1
$region0: #{simple_feed_forward.1}
  #allocation0 [shape = 'u32[]', space=smem, size = 0x4, offset = 0x4, fixed_abs, tag = 'smem constant byte address 0x4 - core index']
  #allocation1 [shape = 'u32[144,128]{1,0:T(1,128)}', space=vmem, size = 0x12000, scoped, tag = 'internal scratch']
  #allocation2 [shape = 'bf16[16,32]{1,0:T(16,128)(2,1)}', space=vmem, size = 0x1000, scoped, tag = 'scratch operand']
  #allocation3 [shape = 'f32[16,32]{1,0:T(8,128)}', space=vmem, size = 0x2000, scoped, tag = 'scratch operand']
  %s0 = inlined_call_operand.vmem [shape: f32[16,32], index: 0, kind: input, shape index: {}]
  %s1 = inlined_call_operand.vmem [shape: f32[1,32], index: 1, kind: input, shape index: {}]
  %s2 = inlined_call_operand.vmem [shape: f32[1,32], index: 2, kind: input, shape index: {}]
  %s3 = inlined_call_operand.vmem [shape: bf16[32,64], index: 3, kind: input, shape index: {}]
  %s4 = inlined_call_operand.vmem [shape: f32[1,64], index: 4, kind: input, shape index: {}]
  %s5 = inlined_call_operand.vmem [shape: bf16[64,32], index: 5, kind: input, shape index: {}]
  %s6 = inlined_call_operand.vmem [shape: f32[1,32], index: 6, kind: input, shape index: {}]
  %s7 = inlined_call_operand.vmem [shape: f32[1,32], index: 7, kind: input, shape index: {}]
  %s8 = inlined_call_operand.vmem [shape: f32[1,32], index: 8, kind: input, shape index: {}]
  %s9 = inlined_call_operand.hbm [shape: f32[16,32], index: 9, kind: output, shape index: {}]
  %s10 = sld [smem:[#allocation0]]
  $region54: #{simple_feed_forward.1} parent=0
    _
  %s12 = ssub.s32 1, %s10
  %s13 = scalar_select 0, %s12, %s10
  $region1: #{simple_feed_forward.1} parent=0
    #allocation4 [shape = 'u8[8192]{0}', space=vmem, size = 0x2000, scoped, tag = 'output window, operand 0, single buffered']
    #allocation5 [shape = 's32[1]{0}', space=sflag, size = 0x4, scoped, tag = 'scoped memory for simple_feed_forward.1']
    %14 = vsyncpa [#allocation5], 0
    // Predicated region
    $region2: #{simple_feed_forward.1} parent=1 // pred_check
      _
    $region3: #{simple_feed_forward.1} parent=1 // pred_check_branch
      %16 = sbr.rel (0) target = $region5
    $region4: #{simple_feed_forward.1} parent=1 // pred_region
      _
    $region5: #{simple_feed_forward.1} parent=1 // pred_fallthru
      _
    // Predicated region
    $region6: #{simple_feed_forward.1} parent=1 // pred_check
      _
    $region7: #{simple_feed_forward.1} parent=1 // pred_check_branch
      %18 = sbr.rel (0) target = $region9
    $region8: #{simple_feed_forward.1} parent=1 // pred_region
      _
    $region9: #{simple_feed_forward.1} parent=1 // pred_fallthru
      _
    // Predicated region
    $region10: #{simple_feed_forward.1} parent=1 // pred_check
      _
    $region11: #{simple_feed_forward.1} parent=1 // pred_check_branch
      %20 = sbr.rel (0) target = $region13
    $region12: #{simple_feed_forward.1} parent=1 // pred_region
      _
    $region13: #{simple_feed_forward.1} parent=1 // pred_fallthru
      _
    // Predicated region
    $region14: #{simple_feed_forward.1} parent=1 // pred_check
      _
    $region15: #{simple_feed_forward.1} parent=1 // pred_check_branch
      %22 = sbr.rel (0) target = $region17
    $region16: #{simple_feed_forward.1} parent=1 // pred_region
      _
    $region17: #{simple_feed_forward.1} parent=1 // pred_fallthru
      _
    // Predicated region
    $region18: #{simple_feed_forward.1} parent=1 // pred_check
      _
    $region19: #{simple_feed_forward.1} parent=1 // pred_check_branch
      %24 = sbr.rel (0) target = $region21
    $region20: #{simple_feed_forward.1} parent=1 // pred_region
      _
    $region21: #{simple_feed_forward.1} parent=1 // pred_fallthru
      _
    // Predicated region
    $region22: #{simple_feed_forward.1} parent=1 // pred_check
      _
    $region23: #{simple_feed_forward.1} parent=1 // pred_check_branch
      %26 = sbr.rel (0) target = $region25
    $region24: #{simple_feed_forward.1} parent=1 // pred_region
      _
    $region25: #{simple_feed_forward.1} parent=1 // pred_fallthru
      _
    // Predicated region
    $region26: #{simple_feed_forward.1} parent=1 // pred_check
      _
    $region27: #{simple_feed_forward.1} parent=1 // pred_check_branch
      %28 = sbr.rel (0) target = $region29
    $region28: #{simple_feed_forward.1} parent=1 // pred_region
      _
    $region29: #{simple_feed_forward.1} parent=1 // pred_fallthru
      _
    // Predicated region
    $region30: #{simple_feed_forward.1} parent=1 // pred_check
      _
    $region31: #{simple_feed_forward.1} parent=1 // pred_check_branch
      %30 = sbr.rel (0) target = $region33
    $region32: #{simple_feed_forward.1} parent=1 // pred_region
      _
    $region33: #{simple_feed_forward.1} parent=1 // pred_fallthru
      _
    // Predicated region
    $region34: #{simple_feed_forward.1} parent=1 // pred_check
      _
    $region35: #{simple_feed_forward.1} parent=1 // pred_check_branch
      %32 = sbr.rel (0) target = $region37
    $region36: #{simple_feed_forward.1} parent=1 // pred_region
      _
    $region37: #{simple_feed_forward.1} parent=1 // pred_fallthru
      _
    %p34 = scmp.eq.s32.totalorder 0, 0
    // Predicated region
    $region38: #{simple_feed_forward.1} parent=1 // pred_check
      %p35 = pneg %p34
    $region39: #{simple_feed_forward.1} parent=1 // pred_check_branch
      %37 = sbr.rel (%p35) target = $region41
    $region40: #{simple_feed_forward.1} parent=1 // pred_region
      %v38 = vld [vmem:[%s0] sm:$0xff]
      %v39 = vld [vmem:[%s0 + $0x8] sm:$0xff]
      %vm40 = vcmask 261120
      %v41 = vsel %vm40, %v38, 0.0
      %42 = vadd.xlane.f32.xlu0 %v41
      %v43 = vpop.xlane.xlu0 %42
      %v44 = vsel %vm40, %v39, 0.0
      %45 = vadd.xlane.f32.xlu0 %v44
      %v46 = vpop.xlane.xlu0 %45
      %v47 = vrcp.pop 32.0
      %v48 = vmul.f32 %v43, %v47
      %v49 = vmul.f32 %v46, %v47
      %v50 = vmul.f32 %v38, %v38
      %v51 = vmul.f32 %v39, %v39
      %v52 = vsel %vm40, %v50, 0.0
      %53 = vadd.xlane.f32.xlu0 %v52
      %v54 = vpop.xlane.xlu0 %53
      %v55 = vsel %vm40, %v51, 0.0
      %56 = vadd.xlane.f32.xlu0 %v55
      %v57 = vpop.xlane.xlu0 %56
      %v58 = vmul.f32 %v54, %v47
      %v59 = vmul.f32 %v57, %v47
      %v60 = vmul.f32 %v48, %v48
      %v61 = vmul.f32 %v49, %v49
      %v62 = vsub.f32 %v58, %v60
      %v63 = vsub.f32 %v59, %v61
      %v64 = vsub.f32 %v38, %v48
      %v65 = vsub.f32 %v39, %v49
      %v66 = vadd.f32 %v62, 1e-05
      %v67 = vadd.f32 %v63, 1e-05
      %v68 = vrsqrt.pop %v66
      %v69 = vrsqrt.pop %v67
      %v70 = vmul.f32 %v64, %v68
      %v71 = vmul.f32 %v65, %v69
      %v72 = vld [vmem:[%s1] sm:$0x1]
      %v74 = vlaneseq
      %v75 = vshrl.u32 %v74, 7
      %v76 = vsub.s32 0, %v75
      %v77 = vrot.slane %v72, %v76
      %v79 = vmul.f32 %v70, %v77
      %v80 = vmul.f32 %v71, %v77
      %v81 = vld [vmem:[%s2] sm:$0x1]
      %v83 = vlaneseq
      %v84 = vshrl.u32 %v83, 7
      %v85 = vsub.s32 0, %v84
      %v86 = vrot.slane %v81, %v85
      %v88 = vadd.f32 %v79, %v86
      %v89 = vadd.f32 %v80, %v86
      %v90 = vpack.c.bf16 %v89, %v88
      %91 = vst.msk [vmem:[#allocation2] sm:$0xff] %vm40, %v90
      %92 = vst.msk [vmem:[#allocation3] sm:$0xff] %vm40, 0.0
      %93 = vst.msk [vmem:[#allocation3 + $0x8] sm:$0xff] %vm40, 0.0
    $region41: #{simple_feed_forward.1} parent=1 // pred_fallthru
      _
    %v94 = vld [vmem:[#allocation2] sm:$0xff]
    %v95 = vld [vmem:[%s3] sm:$0xf]
    %v96 = vld [vmem:[%s3 + $0x4] sm:$0xf]
    %v97 = vld [vmem:[%s3 + $0x8] sm:$0xf]
    %v98 = vld [vmem:[%s3 + $0xc] sm:$0xf]
    %v99 = vld [vmem:[%s4] sm:$0x1]
    %v101 = vlaneseq
    %v102 = vshrl.u32 %v101, 7
    %v103 = vsub.s32 0, %v102
    %v104 = vrot.slane %v99, %v103
    %v110 = vunpack.c.l.b16 %v95
    %v111 = vunpack.c.l.b16 %v96
    %v112 = vunpack.c.l.b16 %v97
    %v113 = vunpack.c.l.b16 %v98
    %v114 = vpack.c.b16 %v111, %v110
    %v115 = vpack.c.b16 %v113, %v112
    %vm118 = vcmask 261120
    %v120 = vsel %vm118, %v94, 0
    %122 = vmatprep.subr.bf16.mxu0 0
    %123 = vmatpush1.bf16.msra.mxu0 %v114
    %124 = vmatprep.subr.bf16.mxu0 0
    %125 = vmatpush1.bf16.msra.mxu0 %v115
    %126 = vmatprep.subr.bf16.mxu0 0
    %127 = vmatpush1.bf16.msra.mxu0 0
    %128 = vmatprep.subr.bf16.mxu0 0
    %129 = vmatpush1.bf16.msra.mxu0 0
    %130 = vmatprep.subr.bf16.mxu0 0
    %131 = vmatpush1.bf16.msra.mxu0 0
    %132 = vmatprep.subr.bf16.mxu0 0
    %133 = vmatpush1.bf16.msra.mxu0 0
    %134 = vmatprep.subr.bf16.mxu0 0
    %135 = vmatpush1.bf16.msra.mxu0 0
    %136 = vmatprep.subr.bf16.mxu0 0
    %137 = vmatpush1.bf16.msra.mxu0 0
    %138 = vmatprep.subr.bf16.mxu0 0
    %139 = vmatpush1.bf16.msra.mxu0 0
    %140 = vmatprep.subr.bf16.mxu0 0
    %141 = vmatpush1.bf16.msra.mxu0 0
    %142 = vmatprep.subr.bf16.mxu0 0
    %143 = vmatpush1.bf16.msra.mxu0 0
    %144 = vmatprep.subr.bf16.mxu0 0
    %145 = vmatpush1.bf16.msra.mxu0 0
    %146 = vmatprep.subr.bf16.mxu0 0
    %147 = vmatpush1.bf16.msra.mxu0 0
    %148 = vmatprep.subr.bf16.mxu0 0
    %149 = vmatpush1.bf16.msra.mxu0 0
    %150 = vmatprep.subr.bf16.mxu0 0
    %151 = vmatpush1.bf16.msra.mxu0 0
    %152 = vmatprep.subr.bf16.mxu0 0
    %153 = vmatpush1.bf16.msra.mxu0 0
    %154 = vmatprep.mubr.bf16.mxu0 0
    %155 = vmatmul.mubr.bf16.gmra.mrb[0].mxu0 %v120
    %v156 = vpop.f32.mrb[0].mxu0
    %v157 = vadd.f32 %v104, %v156
    %v158 = vpop.f32.mrb[0].mxu0
    %v159 = vpop.f32.mrb[0].mxu0
    %v160 = vadd.f32 %v104, %v159
    %v161 = vpop.f32.mrb[0].mxu0
    %162 = vdwg.mxu0
    %v163 = vmul.f32 %v157, 0.5
    %v164 = vmul.f32 %v160, 0.5
    %v165 = vmul.f32 %v157, 0.70710677
    %v166 = vmul.f32 %v160, 0.70710677
    %v167 = vand.u32 2147483647, %v165
    %v168 = vand.u32 2147483647, %v166
    %v169 = vmul.f32 %v167, 0.3275911
    %v170 = vmul.f32 %v168, 0.3275911
    %v171 = vadd.f32 %v169, 1.0
    %v172 = vadd.f32 %v170, 1.0
    %v173 = vrcp.pop %v171
    %v174 = vmul.f32 1.0, %v173
    %v175 = vrcp.pop %v172
    %v176 = vmul.f32 1.0, %v175
    %v177 = vmul.f32 %v174, 1.0614054
    %v178 = vmul.f32 %v176, 1.0614054
    %v179 = vadd.f32 %v177, -1.4531521
    %v180 = vadd.f32 %v178, -1.4531521
    %v181 = vmul.f32 %v174, %v179
    %v182 = vmul.f32 %v176, %v180
    %v183 = vadd.f32 %v181, 1.4214138
    %v184 = vadd.f32 %v182, 1.4214138
    %v185 = vmul.f32 %v174, %v183
    %v186 = vmul.f32 %v176, %v184
    %v187 = vadd.f32 %v185, -0.28449672
    %v188 = vadd.f32 %v186, -0.28449672
    %v189 = vmul.f32 %v174, %v187
    %v190 = vmul.f32 %v176, %v188
    %v191 = vadd.f32 %v189, 0.2548296
    %v192 = vadd.f32 %v190, 0.2548296
    %v193 = vmul.f32 %v174, %v191
    %v194 = vmul.f32 %v176, %v192
    %v195 = vsub.f32 0.0, %v167
    %v196 = vsub.f32 0.0, %v168
    %v197 = vmul.f32 %v195, %v167
    %v198 = vmul.f32 %v196, %v168
    %v199 = vmul.f32 %v197, 1.442695
    %v200 = vpow.pop %v199
    %v201 = vmul.f32 %v198, 1.442695
    %v202 = vpow.pop %v201
    %v203 = vmul.f32 %v193, %v200
    %v204 = vmul.f32 %v194, %v202
    %v205 = vsub.f32 1.0, %v203
    %v206 = vsub.f32 1.0, %v204
    %vm207 = vcmp.lt.f32.partialorder %v165, 0.0
    %vm208 = vcmp.lt.f32.partialorder %v166, 0.0
    %v209 = vsub.f32 0.0, %v205
    %v210 = vsub.f32 0.0, %v206
    %v211 = vsel %vm207, %v209, %v205
    %v212 = vsel %vm208, %v210, %v206
    %v213 = vadd.f32 %v211, 1.0
    %v214 = vadd.f32 %v212, 1.0
    %v215 = vmul.f32 %v163, %v213
    %v216 = vmul.f32 %v164, %v214
    %v217 = vld [vmem:[#allocation3] sm:$0xff]
    %v218 = vld [vmem:[#allocation3 + $0x8] sm:$0xff]
    %v219 = vpack.c.bf16 %v216, %v215
    %v220 = vld [vmem:[%s5] sm:$0xf]
    %v221 = vld [vmem:[%s5 + $0x4] sm:$0xf]
    %v222 = vld [vmem:[%s5 + $0x8] sm:$0xf]
    %v223 = vld [vmem:[%s5 + $0xc] sm:$0xf]
    %v224 = vld [vmem:[%s5 + $0x10] sm:$0xf]
    %v225 = vld [vmem:[%s5 + $0x14] sm:$0xf]
    %v226 = vld [vmem:[%s5 + $0x18] sm:$0xf]
    %v227 = vld [vmem:[%s5 + $0x1c] sm:$0xf]
    %v236 = vunpack.c.l.b16 %v220
    %v237 = vunpack.c.l.b16 %v221
    %v238 = vunpack.c.l.b16 %v222
    %v239 = vunpack.c.l.b16 %v223
    %v240 = vunpack.c.l.b16 %v224
    %v241 = vunpack.c.l.b16 %v225
    %v242 = vunpack.c.l.b16 %v226
    %v243 = vunpack.c.l.b16 %v227
    %v244 = vpack.c.b16 %v237, %v236
    %v245 = vpack.c.b16 %v239, %v238
    %v246 = vpack.c.b16 %v241, %v240
    %v247 = vpack.c.b16 %v243, %v242
    %vm252 = vcmask 523264
    %v254 = vsel %vm252, %v219, 0
    %256 = vmatprep.subr.bf16.mxu0 0
    %257 = vmatpush1.bf16.msra.mxu0 %v244
    %258 = vmatprep.subr.bf16.mxu0 0
    %259 = vmatpush1.bf16.msra.mxu0 %v245
    %260 = vmatprep.subr.bf16.mxu0 0
    %261 = vmatpush1.bf16.msra.mxu0 %v246
    %262 = vmatprep.subr.bf16.mxu0 0
    %263 = vmatpush1.bf16.msra.mxu0 %v247
    %264 = vmatprep.subr.bf16.mxu0 0
    %265 = vmatpush1.bf16.msra.mxu0 0
    %266 = vmatprep.subr.bf16.mxu0 0
    %267 = vmatpush1.bf16.msra.mxu0 0
    %268 = vmatprep.subr.bf16.mxu0 0
    %269 = vmatpush1.bf16.msra.mxu0 0
    %270 = vmatprep.subr.bf16.mxu0 0
    %271 = vmatpush1.bf16.msra.mxu0 0
    %272 = vmatprep.subr.bf16.mxu0 0
    %273 = vmatpush1.bf16.msra.mxu0 0
    %274 = vmatprep.subr.bf16.mxu0 0
    %275 = vmatpush1.bf16.msra.mxu0 0
    %276 = vmatprep.subr.bf16.mxu0 0
    %277 = vmatpush1.bf16.msra.mxu0 0
    %278 = vmatprep.subr.bf16.mxu0 0
    %279 = vmatpush1.bf16.msra.mxu0 0
    %280 = vmatprep.subr.bf16.mxu0 0
    %281 = vmatpush1.bf16.msra.mxu0 0
    %282 = vmatprep.subr.bf16.mxu0 0
    %283 = vmatpush1.bf16.msra.mxu0 0
    %284 = vmatprep.subr.bf16.mxu0 0
    %285 = vmatpush1.bf16.msra.mxu0 0
    %286 = vmatprep.subr.bf16.mxu0 0
    %287 = vmatpush1.bf16.msra.mxu0 0
    %288 = vmatprep.mubr.bf16.mxu0 0
    %289 = vmatmul.mubr.bf16.gmra.mrb[0].mxu0 %v254
    %v290 = vpop.f32.mrb[0].mxu0
    %v291 = vadd.f32 0.0, %v290
    %v292 = vpop.f32.mrb[0].mxu0
    %v293 = vpop.f32.mrb[0].mxu0
    %v294 = vadd.f32 0.0, %v293
    %v295 = vpop.f32.mrb[0].mxu0
    %296 = vdwg.mxu0
    %v297 = vadd.f32 %v217, %v291
    %v298 = vadd.f32 %v218, %v294
    %299 = vst.msk [vmem:[#allocation3] sm:$0xff] %vm118, %v297
    %300 = vst.msk [vmem:[#allocation3 + $0x8] sm:$0xff] %vm118, %v298
    // Predicated region
    $region42: #{simple_feed_forward.1} parent=1 // pred_check
      %p301 = pneg %p34
    $region43: #{simple_feed_forward.1} parent=1 // pred_check_branch
      %303 = sbr.rel (%p301) target = $region45
    $region44: #{simple_feed_forward.1} parent=1 // pred_region
      %v304 = vld [vmem:[#allocation3] sm:$0xff]
      %v305 = vld [vmem:[#allocation3 + $0x8] sm:$0xff]
      %v306 = vld [vmem:[%s6] sm:$0x1]
      %v308 = vlaneseq
      %v309 = vshrl.u32 %v308, 7
      %v310 = vsub.s32 0, %v309
      %v311 = vrot.slane %v306, %v310
      %v313 = vadd.f32 %v304, %v311
      %v314 = vadd.f32 %v305, %v311
      %v315 = vsel %vm118, %v313, 0.0
      %316 = vadd.xlane.f32.xlu0 %v315
      %v317 = vpop.xlane.xlu0 %316
      %v318 = vsel %vm118, %v314, 0.0
      %319 = vadd.xlane.f32.xlu0 %v318
      %v320 = vpop.xlane.xlu0 %319
      %v321 = vrcp.pop 32.0
      %v322 = vmul.f32 %v317, %v321
      %v323 = vmul.f32 %v320, %v321
      %v324 = vmul.f32 %v313, %v313
      %v325 = vmul.f32 %v314, %v314
      %v326 = vsel %vm118, %v324, 0.0
      %327 = vadd.xlane.f32.xlu0 %v326
      %v328 = vpop.xlane.xlu0 %327
      %v329 = vsel %vm118, %v325, 0.0
      %330 = vadd.xlane.f32.xlu0 %v329
      %v331 = vpop.xlane.xlu0 %330
      %v332 = vmul.f32 %v328, %v321
      %v333 = vmul.f32 %v331, %v321
      %v334 = vmul.f32 %v322, %v322
      %v335 = vmul.f32 %v323, %v323
      %v336 = vsub.f32 %v332, %v334
      %v337 = vsub.f32 %v333, %v335
      %v338 = vsub.f32 %v313, %v322
      %v339 = vsub.f32 %v314, %v323
      %v340 = vadd.f32 %v336, 1e-05
      %v341 = vadd.f32 %v337, 1e-05
      %v342 = vrsqrt.pop %v340
      %v343 = vrsqrt.pop %v341
      %v344 = vmul.f32 %v338, %v342
      %v345 = vmul.f32 %v339, %v343
      %v346 = vld [vmem:[%s7] sm:$0x1]
      %v348 = vlaneseq
      %v349 = vshrl.u32 %v348, 7
      %v350 = vsub.s32 0, %v349
      %v351 = vrot.slane %v346, %v350
      %v353 = vmul.f32 %v344, %v351
      %v354 = vmul.f32 %v345, %v351
      %v355 = vld [vmem:[%s8] sm:$0x1]
      %v357 = vlaneseq
      %v358 = vshrl.u32 %v357, 7
      %v359 = vsub.s32 0, %v358
      %v360 = vrot.slane %v355, %v359
      %v362 = vadd.f32 %v353, %v360
      %v363 = vadd.f32 %v354, %v360
      %364 = vst.msk [vmem:[#allocation4] sm:$0xff] %vm118, %v362
      %365 = vst.msk [vmem:[#allocation4 + $0x8] sm:$0xff] %vm118, %v363
    $region45: #{simple_feed_forward.1} parent=1 // pred_fallthru
      _
    // Predicated region
    $region46: #{simple_feed_forward.1} parent=1 // pred_check
      _
    $region47: #{simple_feed_forward.1} parent=1 // pred_check_branch
      %367 = sbr.rel (0) target = $region49
    $region48: #{simple_feed_forward.1} parent=1 // pred_region
      %s369 = ssub.s32 256, 256
      %370 = vsyncadd [#allocation5], %s369
      %s371 = sshll.u32 [#allocation4], 4
      %s372 = int_to_ptr.vmem [resolvable:$true] %s371
      %377 = dma.vmem_to_hbm [thread:$0]  %s372, 256, %s9, [#allocation5], 128, 128, 8
    $region49: #{simple_feed_forward.1} parent=1 // pred_fallthru
      _
    // Predicated region
    $region50: #{simple_feed_forward.1} parent=1 // pred_check
      _
    $region51: #{simple_feed_forward.1} parent=1 // pred_check_branch
      %379 = sbr.rel (0) target = $region53
    $region52: #{simple_feed_forward.1} parent=1 // pred_region
      %380 = dma.done [#allocation5], 256
    $region53: #{simple_feed_forward.1} parent=1 // pred_fallthru
      _
    %381 = vsyncpa [#allocation5], 1

</llo_original>
